<compile_context>
chip_gen: v6e
topology: v6e:2x2x1
jax: 0.10.0
libtpu: 0.0.40
codegen_flags: <defaults>
</compile_context>

<pallas_src>
import jax
import jax.numpy as jnp
from jax.experimental import pallas as pl
from jax.experimental.pallas import tpu as pltpu


def lau_kernel(ub_ref, tgt_ref, mask_ref, w1f_ref, wb_ref, b1_ref, w2_ref, out_ref):
    ub = ub_ref[...]                              # (Bt, T, H)  bf16
    tgt = tgt_ref[...]                            # (Bt, H)     bf16
    bt, t, h = ub.shape

    # fc1: 4H concat folded into split weights; ub / ub*tgt contributions fused
    # along K into a single MXU matmul (K = 2H).
    ub2 = ub.reshape(bt * t, h)
    ubt2 = (ub * tgt[:, None, :]).reshape(bt * t, h)
    lhs = jnp.concatenate([ub2, ubt2], axis=-1)                       # (Bt*T, 2H) bf16
    acc = jnp.dot(lhs, w1f_ref[...], preferred_element_type=jnp.float32)  # (Bt*T, H) f32

    # Rank-Bt target contribution, broadcast over the sequence axis.
    tgt_term = jnp.dot(tgt, wb_ref[...],
                       preferred_element_type=jnp.float32) + b1_ref[...]  # (Bt, H) f32
    x = jnp.maximum(acc.reshape(bt, t, h) + tgt_term[:, None, :], 0.0)    # ReLU, f32

    # fc2 (N=1): VPU multiply + cross-lane reduce instead of an N=1 MXU matmul.
    # fc2 bias dropped (softmax shift-invariance makes it a no-op).
    logits = jnp.sum(x * w2_ref[...], axis=-1)                        # (Bt, T) f32

    # Masked softmax over the sequence (lane) axis, all f32.
    # -1e30 (finite) keeps fully-masked / ragged-tail rows NaN-free.
    logits = jnp.where(mask_ref[...] == 0.0, jnp.float32(-1e30), logits)
    m = jnp.max(logits, axis=-1, keepdims=True)
    e = jnp.exp(logits - m)
    w = e / jnp.sum(e, axis=-1, keepdims=True)                        # exact divide

    # Weighted sum of behaviors over T -> (Bt, H), accumulate in f32.
    # TODO(synk): if the bundle shows XLU saturation from the (Bt,T)->(Bt,T,H)
    # broadcast relayout, produce w in a T-on-sublane layout before this multiply.
    out_ref[...] = jnp.sum(w[:, :, None] * ub.astype(jnp.float32), axis=1)


def _pick_batch_block(B, T, H, ub_itemsize):
    """VMEM-budget-driven batch block size (review: target multi-MiB ub blocks)."""
    per_row = (2 * T * H * ub_itemsize            # ub block (double-buffered)
               + T * 2 * H * ub_itemsize          # fused-K LHS temp (bf16)
               + T * 2 * H * 4                    # acc + x temporaries (f32)
               + 2 * H * ub_itemsize              # tgt
               + 4 * T * 4 + 3 * H * 4)           # mask / logits / output temps
    budget = 24 << 20                             # conservative for v7x's 64 MiB VMEM
    bt = int(max(1, budget // max(per_row, 1)))
    if bt >= B:
        bt = B
        if B >= 16:
            # v7x: keep >= 2 grid steps so ("parallel",) shards over both TCs.
            bt = max(8, ((B // 2) // 8) * 8)
    else:
        bt = min(max(8, (bt // 8) * 8), B)        # sublane-friendly when tiling
    return bt


def local_activation_unit(user_behaviors, target_item, mask, w1, b1, w2, b2,
                          block_b=None):
    """user_behaviors: (B, T, H), target_item: (B, H), mask: (B, T) -> (B, H)"""
    B, T, H = user_behaviors.shape
    f32, bf16 = jnp.float32, jnp.bfloat16

    # bf16 for the HBM-dominant / MXU operands; f32 where the VPU needs it.
    ub = user_behaviors.astype(bf16)
    tgt = target_item.reshape(B, H).astype(bf16)
    msk = mask.reshape(B, T).astype(f32)

    # Fold the [ub, tgt, ub-tgt, ub*tgt] feature concat into split fc1 weights,
    # fusing the ub and ub*tgt pieces along K (built once, tiny).
    w1 = w1.astype(f32)
    w1f = jnp.concatenate([w1[0:H] + w1[2 * H:3 * H],     # multiplies ub
                           w1[3 * H:4 * H]], axis=0)      # multiplies ub*tgt
    w1f = w1f.astype(bf16)                                # (2H, H)
    wb = (w1[H:2 * H] - w1[2 * H:3 * H]).astype(bf16)     # multiplies tgt, (H, H)
    b1r = b1.reshape(1, H).astype(f32)
    w2r = w2.reshape(1, H).astype(f32)                    # fc2 weight as lane-dense row
    # b2 is intentionally unused (softmax shift-invariance).
    del b2

    Bt = block_b if block_b is not None else _pick_batch_block(B, T, H, 2)
    grid = pl.cdiv(B, Bt)   # no jnp.pad: ragged last block uses masked OOB writes

    # VMEM estimate (double-buffered streaming operands + in-kernel f32 temps).
    vmem_est = (2 * Bt * (T * H * 2 + H * 2 + T * 4)
                + 2 * Bt * H * 4
                + 2 * (2 * H * H * 2 + H * H * 2 + 2 * H * 4)
                + Bt * T * (2 * H * 2 + 2 * H * 4 + 8)
                + 4 * Bt * H * 4)
    vmem_limit = int(min(max(2 * vmem_est, 16 << 20), 48 << 20))

    out = pl.pallas_call(
        lau_kernel,
        out_shape=jax.ShapeDtypeStruct((B, H), f32),
        grid_spec=pltpu.PrefetchScalarGridSpec(
            num_scalar_prefetch=0,
            grid=(grid,),
            in_specs=[
                pl.BlockSpec((Bt, T, H), lambda b: (b, 0, 0)),   # user behaviors (bf16)
                pl.BlockSpec((Bt, H), lambda b: (b, 0)),         # target item (bf16)
                pl.BlockSpec((Bt, T), lambda b: (b, 0)),         # mask (lane-dense over T)
                pl.BlockSpec((2 * H, H), lambda b: (0, 0)),      # fused [Wa; Wd] (bf16)
                pl.BlockSpec((H, H), lambda b: (0, 0)),          # Wb (bf16)
                pl.BlockSpec((1, H), lambda b: (0, 0)),          # b1 (f32)
                pl.BlockSpec((1, H), lambda b: (0, 0)),          # w2 row (f32)
            ],
            out_specs=pl.BlockSpec((Bt, H), lambda b: (b, 0)),
        ),
        compiler_params=pltpu.CompilerParams(
            dimension_semantics=("parallel",),
            vmem_limit_bytes=vmem_limit),
    )(ub, tgt, msk, w1f, wb, b1r, w2r)
    return out


def reference(user_behaviors, target_item, mask, w1, b1, w2, b2):
    B, T, H = user_behaviors.shape
    tgt = jnp.broadcast_to(target_item[:, None, :], (B, T, H))
    inter = jnp.concatenate(
        [user_behaviors, tgt, user_behaviors - tgt, user_behaviors * tgt], axis=-1)
    x = jax.nn.relu(inter @ w1 + b1[0])
    logits = (x @ w2 + b2[0])[..., 0]
    logits = jnp.where(mask == 0, -jnp.inf, logits)
    w = jax.nn.softmax(logits, axis=1)[..., None]
    return jnp.sum(w * user_behaviors, axis=1)


if __name__ == "__main__":
    B, T, H = 2, 8, 32

    key = jax.random.PRNGKey(0)
    k_ub, k_tgt, k_w1, k_b1, k_w2, k_b2 = jax.random.split(key, 6)

    user_behaviors = jax.random.normal(k_ub, (B, T, H), dtype=jnp.float32)
    target_item = jax.random.normal(k_tgt, (B, H), dtype=jnp.float32)
    # mask: first 5 positions valid, rest padded (at least one valid per row)
    mask = jnp.broadcast_to((jnp.arange(T)[None, :] < 5), (B, T)).astype(jnp.float32)

    # deterministic synthetic parameters matching the nn.Linear shapes
    w1 = jax.random.normal(k_w1, (4 * H, H), dtype=jnp.float32) * 0.05
    b1 = jax.random.normal(k_b1, (1, H), dtype=jnp.float32) * 0.05
    w2 = jax.random.normal(k_w2, (H, 1), dtype=jnp.float32) * 0.05
    b2 = jax.random.normal(k_b2, (1, 1), dtype=jnp.float32) * 0.05

    out = local_activation_unit(user_behaviors, target_item, mask, w1, b1, w2, b2)
    out = jax.block_until_ready(out)

    ref = reference(user_behaviors, target_item, mask, w1, b1, w2, b2)
    assert out.shape == (B, H)
    # bf16 HBM/MXU operands (perf review) vs a pure-f32 reference -> validate at
    # 2e-2; softmax, logits and all accumulation remain f32 in the kernel.
    assert jnp.allclose(out, ref, atol=2e-2, rtol=2e-2), "mismatch vs reference"

    print("KERNEL_OK")
</pallas_src>

<mosaic_0001>
module attributes {stable_mosaic.version = 11 : i64} {
  func.func @lau_kernel(%arg0: i32, %arg1: memref<2x8x32xbf16, #tpu.memory_space<vmem>>, %arg2: memref<2x32xbf16, #tpu.memory_space<vmem>>, %arg3: memref<2x8xf32, #tpu.memory_space<vmem>>, %arg4: memref<64x32xbf16, #tpu.memory_space<vmem>>, %arg5: memref<32x32xbf16, #tpu.memory_space<vmem>>, %arg6: memref<1x32xf32, #tpu.memory_space<vmem>>, %arg7: memref<1x32xf32, #tpu.memory_space<vmem>>, %arg8: memref<2x32xf32, #tpu.memory_space<vmem>>) attributes {dimension_semantics = [#tpu.dimension_semantics<parallel>], iteration_bounds = array<i64: 1>, scalar_prefetch = 0 : i64, scratch_operands = 0 : i64, tpu.core_type = #tpu.core_type<tc>, window_params = [{transform_indices = @transform_0, window_bounds = array<i64: 2, 8, 32>}, {transform_indices = @transform_1, window_bounds = array<i64: 2, 32>}, {transform_indices = @transform_2, window_bounds = array<i64: 2, 8>}, {pipeline_mode = #tpu.pipeline_mode<synchronous>, transform_indices = @transform_3, window_bounds = array<i64: 64, 32>}, {pipeline_mode = #tpu.pipeline_mode<synchronous>, transform_indices = @transform_4, window_bounds = array<i64: 32, 32>}, {pipeline_mode = #tpu.pipeline_mode<synchronous>, transform_indices = @transform_5, window_bounds = array<i64: 1, 32>}, {pipeline_mode = #tpu.pipeline_mode<synchronous>, transform_indices = @transform_6, window_bounds = array<i64: 1, 32>}, {transform_indices = @transform_7, window_bounds = array<i64: 2, 32>}]} {
    %c0 = arith.constant 0 : index
    %c0_0 = arith.constant 0 : index
    %c0_1 = arith.constant 0 : index
    %0 = vector.load %arg1[%c0, %c0_0, %c0_1] : memref<2x8x32xbf16, #tpu.memory_space<vmem>>, vector<2x8x32xbf16>
    %c0_2 = arith.constant 0 : index
    %c0_3 = arith.constant 0 : index
    %1 = vector.load %arg2[%c0_2, %c0_3] : memref<2x32xbf16, #tpu.memory_space<vmem>>, vector<2x32xbf16>
    %2 = vector.shape_cast %0 : vector<2x8x32xbf16> to vector<16x32xbf16>
    %3 = vector.shape_cast %1 : vector<2x32xbf16> to vector<2x1x32xbf16>
    %4 = vector.broadcast %3 : vector<2x1x32xbf16> to vector<2x8x32xbf16>
    %5 = arith.mulf %0, %4 : vector<2x8x32xbf16>
    %6 = vector.shape_cast %5 : vector<2x8x32xbf16> to vector<16x32xbf16>
    %7 = tpu.concatenate %2, %6 in 1 : vector<16x32xbf16>, vector<16x32xbf16> -> vector<16x64xbf16>
    %c0_4 = arith.constant 0 : index
    %c0_5 = arith.constant 0 : index
    %8 = vector.load %arg4[%c0_4, %c0_5] : memref<64x32xbf16, #tpu.memory_space<vmem>>, vector<64x32xbf16>
    %cst = arith.constant dense<0.000000e+00> : vector<16x32xf32>
    %9 = tpu.matmul %7, %8, %cst {dimension_numbers = #tpu.dot_dimension_numbers<[1], [0], [0], [1], [0, 0, 1, 1], [], []>} : vector<16x64xbf16>, vector<64x32xbf16>, vector<16x32xf32> -> vector<16x32xf32>
    %c0_6 = arith.constant 0 : index
    %c0_7 = arith.constant 0 : index
    %10 = vector.load %arg5[%c0_6, %c0_7] : memref<32x32xbf16, #tpu.memory_space<vmem>>, vector<32x32xbf16>
    %cst_8 = arith.constant dense<0.000000e+00> : vector<2x32xf32>
    %11 = tpu.matmul %1, %10, %cst_8 {dimension_numbers = #tpu.dot_dimension_numbers<[1], [0], [0], [1], [0, 0, 1, 1], [], []>} : vector<2x32xbf16>, vector<32x32xbf16>, vector<2x32xf32> -> vector<2x32xf32>
    %c0_9 = arith.constant 0 : index
    %c0_10 = arith.constant 0 : index
    %12 = vector.load %arg6[%c0_9, %c0_10] : memref<1x32xf32, #tpu.memory_space<vmem>>, vector<1x32xf32>
    %13 = vector.broadcast %12 : vector<1x32xf32> to vector<2x32xf32>
    %14 = arith.addf %11, %13 : vector<2x32xf32>
    %15 = vector.shape_cast %9 : vector<16x32xf32> to vector<2x8x32xf32>
    %16 = vector.shape_cast %14 : vector<2x32xf32> to vector<2x1x32xf32>
    %17 = vector.broadcast %16 : vector<2x1x32xf32> to vector<2x8x32xf32>
    %18 = arith.addf %15, %17 : vector<2x8x32xf32>
    %cst_11 = arith.constant 0.000000e+00 : f32
    %19 = vector.broadcast %cst_11 : f32 to vector<2x8x32xf32>
    %20 = arith.maximumf %18, %19 : vector<2x8x32xf32>
    %c0_12 = arith.constant 0 : index
    %c0_13 = arith.constant 0 : index
    %21 = vector.load %arg7[%c0_12, %c0_13] : memref<1x32xf32, #tpu.memory_space<vmem>>, vector<1x32xf32>
    %22 = vector.shape_cast %21 : vector<1x32xf32> to vector<1x1x32xf32>
    %23 = vector.broadcast %22 : vector<1x1x32xf32> to vector<2x8x32xf32>
    %24 = arith.mulf %20, %23 : vector<2x8x32xf32>
    %cst_14 = arith.constant dense<0.000000e+00> : vector<2x8xf32>
    %25 = vector.multi_reduction <add>, %24, %cst_14 [2] : vector<2x8x32xf32> to vector<2x8xf32>
    %c0_15 = arith.constant 0 : index
    %c0_16 = arith.constant 0 : index
    %26 = vector.load %arg3[%c0_15, %c0_16] : memref<2x8xf32, #tpu.memory_space<vmem>>, vector<2x8xf32>
    %cst_17 = arith.constant 0.000000e+00 : f32
    %27 = vector.broadcast %cst_17 : f32 to vector<2x8xf32>
    %28 = arith.cmpf oeq, %26, %27 : vector<2x8xf32>
    %cst_18 = arith.constant -1.000000e+30 : f32
    %29 = vector.broadcast %cst_18 : f32 to vector<2x8xf32>
    %30 = arith.select %28, %29, %25 : vector<2x8xi1>, vector<2x8xf32>
    %cst_19 = arith.constant dense<0xFF800000> : vector<2xf32>
    %31 = vector.multi_reduction <maximumf>, %30, %cst_19 [1] : vector<2x8xf32> to vector<2xf32>
    %32 = vector.shape_cast %31 : vector<2xf32> to vector<2x1xf32>
    %33 = vector.broadcast %32 : vector<2x1xf32> to vector<2x8xf32>
    %34 = arith.subf %30, %33 : vector<2x8xf32>
    %35 = math.exp %34 : vector<2x8xf32>
    %cst_20 = arith.constant dense<0.000000e+00> : vector<2xf32>
    %36 = vector.multi_reduction <add>, %35, %cst_20 [1] : vector<2x8xf32> to vector<2xf32>
    %37 = vector.shape_cast %36 : vector<2xf32> to vector<2x1xf32>
    %38 = vector.broadcast %37 : vector<2x1xf32> to vector<2x8xf32>
    %39 = arith.divf %35, %38 : vector<2x8xf32>
    %40 = vector.shape_cast %39 : vector<2x8xf32> to vector<2x8x1xf32>
    %41 = arith.extf %0 : vector<2x8x32xbf16> to vector<2x8x32xf32>
    %42 = vector.broadcast %40 : vector<2x8x1xf32> to vector<2x8x32xf32>
    %43 = arith.mulf %42, %41 : vector<2x8x32xf32>
    %cst_21 = arith.constant dense<0.000000e+00> : vector<2x32xf32>
    %44 = vector.multi_reduction <add>, %43, %cst_21 [1] : vector<2x8x32xf32> to vector<2x32xf32>
    %c0_22 = arith.constant 0 : index
    %c0_23 = arith.constant 0 : index
    %45 = vector.load %arg8[%c0_22, %c0_23] : memref<2x32xf32, #tpu.memory_space<vmem>>, vector<2x32xf32>
    tpu.vector_store %arg8[%c0_22, %c0_23], %44 {strides = array<i32>} : memref<2x32xf32, #tpu.memory_space<vmem>>, vector<2x32xf32>,
    return
  }
  func.func @transform_0(%arg0: i32) -> (i32, i32, i32) {
    %c0_i32 = arith.constant 0 : i32
    %c0_i32_0 = arith.constant 0 : i32
    %c0_i32_1 = arith.constant 0 : i32
    return %arg0, %c0_i32, %c0_i32_0 : i32, i32, i32
  }
  func.func @transform_1(%arg0: i32) -> (i32, i32) {
    %c0_i32 = arith.constant 0 : i32
    %c0_i32_0 = arith.constant 0 : i32
    return %arg0, %c0_i32 : i32, i32
  }
  func.func @transform_2(%arg0: i32) -> (i32, i32) {
    %c0_i32 = arith.constant 0 : i32
    %c0_i32_0 = arith.constant 0 : i32
    return %arg0, %c0_i32 : i32, i32
  }
  func.func @transform_3(%arg0: i32) -> (i32, i32) {
    %c0_i32 = arith.constant 0 : i32
    %c0_i32_0 = arith.constant 0 : i32
    %c0_i32_1 = arith.constant 0 : i32
    return %c0_i32, %c0_i32_0 : i32, i32
  }
  func.func @transform_4(%arg0: i32) -> (i32, i32) {
    %c0_i32 = arith.constant 0 : i32
    %c0_i32_0 = arith.constant 0 : i32
    %c0_i32_1 = arith.constant 0 : i32
    return %c0_i32, %c0_i32_0 : i32, i32
  }
  func.func @transform_5(%arg0: i32) -> (i32, i32) {
    %c0_i32 = arith.constant 0 : i32
    %c0_i32_0 = arith.constant 0 : i32
    %c0_i32_1 = arith.constant 0 : i32
    return %c0_i32, %c0_i32_0 : i32, i32
  }
  func.func @transform_6(%arg0: i32) -> (i32, i32) {
    %c0_i32 = arith.constant 0 : i32
    %c0_i32_0 = arith.constant 0 : i32
    %c0_i32_1 = arith.constant 0 : i32
    return %c0_i32, %c0_i32_0 : i32, i32
  }
  func.func @transform_7(%arg0: i32) -> (i32, i32) {
    %c0_i32 = arith.constant 0 : i32
    %c0_i32_0 = arith.constant 0 : i32
    return %arg0, %c0_i32 : i32, i32
  }
}

</mosaic_0001>

<llo_original>
// kernel: tpu_custom_call.1
$region0: #{tpu_custom_call.1}
  #allocation0 [shape = 'u32[]', space=smem, size = 0x4, offset = 0x4, fixed_abs, tag = 'smem constant byte address 0x4 - core index']
  #allocation1 [shape = 'u32[144,128]{1,0:T(1,128)}', space=vmem, size = 0x12000, scoped, tag = 'internal scratch']
  %s0 = inlined_call_operand.vmem [shape: bf16[2,8,32], index: 0, kind: input, shape index: {}]
  %s1 = inlined_call_operand.vmem [shape: bf16[2,32], index: 1, kind: input, shape index: {}]
  %s2 = inlined_call_operand.vmem [shape: f32[2,8], index: 2, kind: input, shape index: {}]
  %s3 = inlined_call_operand.vmem [shape: bf16[64,32], index: 3, kind: input, shape index: {}]
  %s4 = inlined_call_operand.vmem [shape: bf16[32,32], index: 4, kind: input, shape index: {}]
  %s5 = inlined_call_operand.vmem [shape: f32[1,32], index: 5, kind: input, shape index: {}]
  %s6 = inlined_call_operand.vmem [shape: f32[1,32], index: 6, kind: input, shape index: {}]
  %s7 = inlined_call_operand.hbm [shape: f32[2,32], index: 7, kind: output, shape index: {}]
  %s8 = sld [smem:[#allocation0]]
  $region38: #{tpu_custom_call.1} parent=0
    _
  %s10 = ssub.s32 1, %s8
  %s11 = scalar_select 0, %s10, %s8
  $region1: #{tpu_custom_call.1} parent=0
    #allocation2 [shape = 'u8[1024]{0}', space=vmem, size = 0x400, scoped, tag = 'output window, operand 0, single buffered']
    #allocation3 [shape = 's32[1]{0}', space=sflag, size = 0x4, scoped, tag = 'scoped memory for tpu_custom_call.1']
    %12 = vsyncpa [#allocation3], 0
    // Predicated region
    $region2: #{tpu_custom_call.1} parent=1 // pred_check
      _
    $region3: #{tpu_custom_call.1} parent=1 // pred_check_branch
      %14 = sbr.rel (0) target = $region5
    $region4: #{tpu_custom_call.1} parent=1 // pred_region
      _
    $region5: #{tpu_custom_call.1} parent=1 // pred_fallthru
      _
    // Predicated region
    $region6: #{tpu_custom_call.1} parent=1 // pred_check
      _
    $region7: #{tpu_custom_call.1} parent=1 // pred_check_branch
      %16 = sbr.rel (0) target = $region9
    $region8: #{tpu_custom_call.1} parent=1 // pred_region
      _
    $region9: #{tpu_custom_call.1} parent=1 // pred_fallthru
      _
    // Predicated region
    $region10: #{tpu_custom_call.1} parent=1 // pred_check
      _
    $region11: #{tpu_custom_call.1} parent=1 // pred_check_branch
      %18 = sbr.rel (0) target = $region13
    $region12: #{tpu_custom_call.1} parent=1 // pred_region
      _
    $region13: #{tpu_custom_call.1} parent=1 // pred_fallthru
      _
    // Predicated region
    $region14: #{tpu_custom_call.1} parent=1 // pred_check
      _
    $region15: #{tpu_custom_call.1} parent=1 // pred_check_branch
      %20 = sbr.rel (0) target = $region17
    $region16: #{tpu_custom_call.1} parent=1 // pred_region
      _
    $region17: #{tpu_custom_call.1} parent=1 // pred_fallthru
      _
    // Predicated region
    $region18: #{tpu_custom_call.1} parent=1 // pred_check
      _
    $region19: #{tpu_custom_call.1} parent=1 // pred_check_branch
      %22 = sbr.rel (0) target = $region21
    $region20: #{tpu_custom_call.1} parent=1 // pred_region
      _
    $region21: #{tpu_custom_call.1} parent=1 // pred_fallthru
      _
    // Predicated region
    $region22: #{tpu_custom_call.1} parent=1 // pred_check
      _
    $region23: #{tpu_custom_call.1} parent=1 // pred_check_branch
      %24 = sbr.rel (0) target = $region25
    $region24: #{tpu_custom_call.1} parent=1 // pred_region
      _
    $region25: #{tpu_custom_call.1} parent=1 // pred_fallthru
      _
    // Predicated region
    $region26: #{tpu_custom_call.1} parent=1 // pred_check
      _
    $region27: #{tpu_custom_call.1} parent=1 // pred_check_branch
      %26 = sbr.rel (0) target = $region29
    $region28: #{tpu_custom_call.1} parent=1 // pred_region
      _
    $region29: #{tpu_custom_call.1} parent=1 // pred_fallthru
      _
    %v28 = vld [vmem:[%s0] sm:$0xf]
    %v29 = vld [vmem:[%s0 + $0x4] sm:$0xf]
    %v30 = vld [vmem:[%s1] sm:$0x1]
    %v32 = vunpack.i.l.s16 %v30
    %v33 = vunpack.i.h.s16 %v30
    %v34 = vpack.i.b16 %v32, %v32
    %v35 = vpack.i.b16 %v33, %v33
    %v36 = vlaneseq
    %v37 = vshrl.u32 %v36, 7
    %v38 = vsub.s32 0, %v37
    %v39 = vrot.slane %v34, %v38
    %v40 = vlaneseq
    %v41 = vshrl.u32 %v40, 7
    %v42 = vsub.s32 0, %v41
    %v43 = vrot.slane %v35, %v42
    %v45 = vpack.i.b16 %v39, %v39
    %v47 = vlaneseq
    %v48 = vshrl.u32 %v47, 7
    %v49 = vsub.s32 0, %v48
    %v50 = vrot.slane %v45, %v49
    %v52 = vpack.i.b16 %v43, %v43
    %v54 = vlaneseq
    %v55 = vshrl.u32 %v54, 7
    %v56 = vsub.s32 0, %v55
    %v57 = vrot.slane %v52, %v56
    %v58 = vmul.bf16 %v28, %v50
    %v59 = vmul.bf16 %v29, %v57
    %v62 = vunpack.c.l.b16 %v28
    %v63 = vunpack.c.l.b16 %v29
    %v64 = vpack.c.b16 %v63, %v62
    %v67 = vunpack.c.l.b16 %v58
    %v68 = vunpack.c.l.b16 %v59
    %v69 = vpack.c.b16 %v68, %v67
    %70 = vrot.lane.b32.xlu0 %v69, 32
    %v71 = vpop.permute.xlu0 %70
    %vm72 = vcmask 261120
    %v75 = vsel %vm72, %v64, %v71
    %v76 = vld [vmem:[%s3] sm:$0xf]
    %v77 = vld [vmem:[%s3 + $0x4] sm:$0xf]
    %v78 = vld [vmem:[%s3 + $0x8] sm:$0xf]
    %v79 = vld [vmem:[%s3 + $0xc] sm:$0xf]
    %v80 = vld [vmem:[%s3 + $0x10] sm:$0xf]
    %v81 = vld [vmem:[%s3 + $0x14] sm:$0xf]
    %v82 = vld [vmem:[%s3 + $0x18] sm:$0xf]
    %v83 = vld [vmem:[%s3 + $0x1c] sm:$0xf]
    %v92 = vunpack.c.l.b16 %v76
    %v93 = vunpack.c.l.b16 %v77
    %v94 = vunpack.c.l.b16 %v78
    %v95 = vunpack.c.l.b16 %v79
    %v96 = vunpack.c.l.b16 %v80
    %v97 = vunpack.c.l.b16 %v81
    %v98 = vunpack.c.l.b16 %v82
    %v99 = vunpack.c.l.b16 %v83
    %v100 = vpack.c.b16 %v93, %v92
    %v101 = vpack.c.b16 %v95, %v94
    %v102 = vpack.c.b16 %v97, %v96
    %v103 = vpack.c.b16 %v99, %v98
    %vm108 = vcmask 523264
    %v109 = vsel %vm108, %v75, 0
    %111 = vmatprep.subr.bf16.mxu0 0
    %112 = vmatpush1.bf16.msra.mxu0 0
    %113 = vmatprep.subr.bf16.mxu0 0
    %114 = vmatpush1.bf16.msra.mxu0 0
    %115 = vmatprep.subr.bf16.mxu0 0
    %116 = vmatpush1.bf16.msra.mxu0 0
    %117 = vmatprep.subr.bf16.mxu0 0
    %118 = vmatpush1.bf16.msra.mxu0 0
    %119 = vmatprep.subr.bf16.mxu0 0
    %120 = vmatpush1.bf16.msra.mxu0 %v103
    %121 = vmatprep.subr.bf16.mxu0 0
    %122 = vmatpush1.bf16.msra.mxu0 %v102
    %123 = vmatprep.subr.bf16.mxu0 0
    %124 = vmatpush1.bf16.msra.mxu0 %v101
    %125 = vmatprep.subr.bf16.mxu0 0
    %126 = vmatpush1.bf16.msra.mxu0 %v100
    %127 = vmatprep.subr.bf16.mxu0 0
    %128 = vmatpush2.bf16.msra.mxu0 0
    %129 = vmatprep.subr.bf16.mxu0 0
    %130 = vmatpush2.bf16.msra.mxu0 0
    %131 = vmatprep.subr.bf16.mxu0 0
    %132 = vmatpush2.bf16.msra.mxu0 0
    %133 = vmatprep.subr.bf16.mxu0 0
    %134 = vmatpush2.bf16.msra.mxu0 0
    %135 = vmatprep.subr.bf16.mxu0 0
    %136 = vmatpush2.bf16.msra.mxu0 0
    %137 = vmatprep.subr.bf16.mxu0 0
    %138 = vmatpush2.bf16.msra.mxu0 0
    %139 = vmatprep.subr.bf16.mxu0 0
    %140 = vmatpush2.bf16.msra.mxu0 0
    %141 = vmatprep.subr.bf16.mxu0 0
    %142 = vmatpush2.bf16.msra.mxu0 0
    %143 = vmatprep.mubr.bf16.mxu0 0
    %144 = vmatmul.mubr.bf16.gmra.mxu0 %v109
    %v145 = vpop.f32.mrf.mxu0
    %v146 = vadd.f32 0.0, %v145
    %v147 = vpop.f32.mrf.mxu0
    %v148 = vpop.f32.mrf.mxu0
    %v149 = vadd.f32 0.0, %v148
    %v150 = vpop.f32.mrf.mxu0
    %151 = vdwg.mxu0
    %v152 = vld [vmem:[%s4] sm:$0xf]
    %v153 = vld [vmem:[%s4 + $0x4] sm:$0xf]
    %v154 = vld [vmem:[%s4 + $0x8] sm:$0xf]
    %v155 = vld [vmem:[%s4 + $0xc] sm:$0xf]
    %v156 = vld [vmem:[%s5] sm:$0x1]
    %v158 = vlaneseq
    %v159 = vshrl.u32 %v158, 7
    %v160 = vsub.s32 0, %v159
    %v161 = vrot.slane %v156, %v160
    %v167 = vunpack.c.l.b16 %v152
    %v168 = vunpack.c.l.b16 %v153
    %v169 = vunpack.c.l.b16 %v154
    %v170 = vunpack.c.l.b16 %v155
    %v171 = vpack.c.b16 %v168, %v167
    %v172 = vpack.c.b16 %v170, %v169
    %v176 = vsel %vm72, %v30, 0
    %178 = vmatprep.subr.bf16.mxu0 0
    %179 = vmatpush1.bf16.msra.mxu0 0
    %180 = vmatprep.subr.bf16.mxu0 0
    %181 = vmatpush1.bf16.msra.mxu0 0
    %182 = vmatprep.subr.bf16.mxu0 0
    %183 = vmatpush1.bf16.msra.mxu0 0
    %184 = vmatprep.subr.bf16.mxu0 0
    %185 = vmatpush1.bf16.msra.mxu0 0
    %186 = vmatprep.subr.bf16.mxu0 0
    %187 = vmatpush1.bf16.msra.mxu0 0
    %188 = vmatprep.subr.bf16.mxu0 0
    %189 = vmatpush1.bf16.msra.mxu0 0
    %190 = vmatprep.subr.bf16.mxu0 0
    %191 = vmatpush1.bf16.msra.mxu0 %v172
    %192 = vmatprep.subr.bf16.mxu0 0
    %193 = vmatpush1.bf16.msra.mxu0 %v171
    %194 = vmatprep.subr.bf16.mxu0 0
    %195 = vmatpush2.bf16.msra.mxu0 0
    %196 = vmatprep.subr.bf16.mxu0 0
    %197 = vmatpush2.bf16.msra.mxu0 0
    %198 = vmatprep.subr.bf16.mxu0 0
    %199 = vmatpush2.bf16.msra.mxu0 0
    %200 = vmatprep.subr.bf16.mxu0 0
    %201 = vmatpush2.bf16.msra.mxu0 0
    %202 = vmatprep.subr.bf16.mxu0 0
    %203 = vmatpush2.bf16.msra.mxu0 0
    %204 = vmatprep.subr.bf16.mxu0 0
    %205 = vmatpush2.bf16.msra.mxu0 0
    %206 = vmatprep.subr.bf16.mxu0 0
    %207 = vmatpush2.bf16.msra.mxu0 0
    %208 = vmatprep.subr.bf16.mxu0 0
    %209 = vmatpush2.bf16.msra.mxu0 0
    %210 = vmatprep.mubr.bf16.mxu0 0
    %211 = vmatmul.mubr.bf16.gmra.mxu0 %v176
    %v212 = vpop.f32.mrf.mxu0
    %v213 = vadd.f32 %v161, %v212
    %v214 = vpop.f32.mrf.mxu0
    %v215 = vpop.f32.mrf.mxu0
    %v216 = vpop.f32.mrf.mxu0
    %217 = vdwg.mxu0
    %v220 = vunpack.c.l.s4 1966171168
    %v221 = vunpack.c.0.s8 %v220
    %v222 = vlaneseq
    %v223 = vshrl.u32 %v222, 7
    %v224 = vsub.s32 %v221, %v223
    %v225 = vrot.slane %v213, %v224
    %v226 = vcombine.high %v225, %v225
    %v228 = vunpack.c.l.s4 1966171168
    %v229 = vunpack.c.0.s8 %v228
    %v230 = vlaneseq
    %v231 = vshrl.u32 %v230, 7
    %v232 = vsub.s32 %v229, %v231
    %v233 = vrot.slane %v225, %v232
    %v235 = vunpack.c.l.s4 1966171168
    %v236 = vunpack.c.0.s8 %v235
    %v237 = vlaneseq
    %v238 = vshrl.u32 %v237, 7
    %v239 = vsub.s32 %v236, %v238
    %v240 = vrot.slane %v226, %v239
    %v241 = vlaneseq
    %v242 = vshrl.u32 %v241, 7
    %v243 = vsub.s32 0, %v242
    %v244 = vrot.slane %v233, %v243
    %v245 = vlaneseq
    %v246 = vshrl.u32 %v245, 7
    %v247 = vsub.s32 0, %v246
    %v248 = vrot.slane %v240, %v247
    %v251 = vadd.f32 %v146, %v244
    %v252 = vadd.f32 %v149, %v248
    %v253 = vmax.f32 %v251, 0.0
    %v254 = vmax.f32 %v252, 0.0
    %v255 = vld [vmem:[%s6] sm:$0x1]
    %v257 = vlaneseq
    %v258 = vshrl.u32 %v257, 7
    %v259 = vsub.s32 0, %v258
    %v260 = vrot.slane %v255, %v259
    %v262 = vmul.f32 %v253, %v260
    %v263 = vmul.f32 %v254, %v260
    %v264 = vsel %vm72, %v262, 0.0
    %265 = vadd.xlane.f32.xlu0 %v264
    %v266 = vpop.xlane.xlu0 %265
    %v267 = vsel %vm72, %v263, 0.0
    %268 = vadd.xlane.f32.xlu0 %v267
    %v269 = vpop.xlane.xlu0 %268
    %v270 = vld [vmem:[%s2] sm:$0x3]
    %vm271 = vcmp.eq.f32.partialorder %v270, 0.0
    %v274 = vlaneseq
    %v275 = vand.u32 %v274, 127
    %v276 = vlaneseq
    %v277 = vshrl.u32 %v276, 7
    %v278 = vsub.s32 %v275, %v277
    %v279 = vrot.slane %v266, %v278
    %v280 = vlaneseq
    %v281 = vshrl.u32 %v280, 7
    %v282 = vsub.s32 %v275, %v281
    %v283 = vrot.slane %v269, %v282
    %vm284 = vcmask 1041409
    %v285 = vsel %vm284, %v283, %v279
    %v287 = vsel %vm271, -1e+30, %v285
    %vm288 = vcmask 58368
    %v289 = vsel %vm288, %v287, -inf
    %290 = vmax.xlane.f32.xlu0 %v289
    %v291 = vpop.xlane.xlu0 %290
    %v292 = vsub.f32 %v287, %v291
    %v293 = vmul.f32 %v292, 1.442695
    %v294 = vpow.pop %v293
    %v295 = vsel %vm288, %v294, 0.0
    %296 = vadd.xlane.f32.xlu0 %v295
    %v297 = vpop.xlane.xlu0 %296
    %v298 = vrcp.pop %v297
    %v299 = vmul.f32 %v294, %v298
    %v300 = vlaneseq
    %v301 = vshrl.u32 %v300, 7
    %v302 = vsub.s32 0, %v301
    %v303 = vrot.slane %v299, %v302
    %305 = vbcast.lane.b32.xlu0 %v303, 256
    %v306 = vpop.permute.xlu0 %305
    %v307 = vlaneseq
    %v308 = vshrl.u32 %v307, 7
    %v309 = vsub.s32 1, %v308
    %v310 = vrot.slane %v299, %v309
    %312 = vbcast.lane.b32.xlu0 %v310, 256
    %v313 = vpop.permute.xlu0 %312
    %v314 = vunpack.c.l.bf16 %v28
    %v315 = vunpack.c.l.bf16 %v29
    %v316 = vmul.f32 %v306, %v314
    %v317 = vmul.f32 %v313, %v315
    %v318 = vsel %vm72, %v316, 0.0
    %v319 = vrot.slane %v318, 4
    %v320 = vadd.f32 %v318, %v319
    %v321 = vrot.slane %v320, 2
    %v322 = vadd.f32 %v320, %v321
    %v323 = vrot.slane %v322, 1
    %v324 = vadd.f32 %v322, %v323
    %v325 = vsel %vm72, %v317, 0.0
    %v326 = vrot.slane %v325, 4
    %v327 = vadd.f32 %v325, %v326
    %v328 = vrot.slane %v327, 2
    %v329 = vadd.f32 %v327, %v328
    %v330 = vrot.slane %v329, 1
    %v331 = vadd.f32 %v329, %v330
    %v334 = vsel %vm284, %v331, %v324
    %vm336 = vcmask 254976
    %337 = vst.msk [vmem:[#allocation2] sm:$0x3] %vm336, %v334
    // Predicated region
    $region30: #{tpu_custom_call.1} parent=1 // pred_check
      _
    $region31: #{tpu_custom_call.1} parent=1 // pred_check_branch
      %339 = sbr.rel (0) target = $region33
    $region32: #{tpu_custom_call.1} parent=1 // pred_region
      %s341 = ssub.s32 32, 32
      %342 = vsyncadd [#allocation3], %s341
      %s344 = sshll.u32 [#allocation2], 4
      %s345 = int_to_ptr.vmem [resolvable:$true] %s344
      %347 = dma.vmem_to_hbm [thread:$0]  %s345, 32, %s7, [#allocation3]
    $region33: #{tpu_custom_call.1} parent=1 // pred_fallthru
      _
    // Predicated region
    $region34: #{tpu_custom_call.1} parent=1 // pred_check
      _
    $region35: #{tpu_custom_call.1} parent=1 // pred_check_branch
      %349 = sbr.rel (0) target = $region37
    $region36: #{tpu_custom_call.1} parent=1 // pred_region
      %350 = dma.done [#allocation3], 32
    $region37: #{tpu_custom_call.1} parent=1 // pred_fallthru
      _
    %351 = vsyncpa [#allocation3], 1

</llo_original>
